<compile_context>
chip_gen: v6e
topology: v6e:2x2x1
jax: 0.10.0
libtpu: 0.0.40
codegen_flags: <defaults>
</compile_context>

<pallas_src>
import functools

import jax
import jax.numpy as jnp
from jax.experimental import pallas as pl
from jax.experimental.pallas import tpu as pltpu


# ----------------------------------------------------------------------------
# helpers
# ----------------------------------------------------------------------------

def _round_up(x, m):
    return (x + m - 1) // m * m


def _pad_axis(arr, axis, target):
    pad = target - arr.shape[axis]
    if pad == 0:
        return arr
    widths = [(0, 0)] * arr.ndim
    widths[axis] = (0, pad)
    return jnp.pad(arr, widths)


def _fold_bn(gamma, beta, mean, var, eps=1e-5):
    scale = gamma / jnp.sqrt(var + eps)
    bias = beta - mean * scale
    return scale, bias


_VMEM_LIMIT = 32 * 1024 * 1024  # safe on v5e/v6e/v7x; all blocks sized well under it


# ----------------------------------------------------------------------------
# Pallas kernels
# ----------------------------------------------------------------------------

def _mm_bias_act_kernel(x_ref, w_ref, b_ref, o_ref, *, relu):
    # x_ref: (TM, K), w_ref: (K, TN) [BN scale pre-folded], b_ref: (1, TN) f32
    y = jnp.dot(x_ref[...], w_ref[...], preferred_element_type=jnp.float32)
    y = y + b_ref[...]
    if relu:
        y = jnp.maximum(y, 0.0)
    o_ref[...] = y.astype(o_ref.dtype)


def _mm_bias_add_relu_kernel(x_ref, w_ref, b_ref, id_ref, o_ref):
    # conv3 epilogue: bias + residual add + ReLU, all in f32.
    y = jnp.dot(x_ref[...], w_ref[...], preferred_element_type=jnp.float32)
    y = y + b_ref[...] + id_ref[...].astype(jnp.float32)
    o_ref[...] = jnp.maximum(y, 0.0).astype(o_ref.dtype)


def _conv3x3_kernel(x_ref, w_ref, b_ref, o_ref, patch_ref, acc_ref):
    # x_ref : (1, H+2, W+2, C)  spatially pre-padded conv1 output (one image)
    # w_ref : (3, 3*C, TN)      kh-indexed, kw folded into the contraction dim
    # b_ref : (1, TN) f32
    # o_ref : (1, H, W, TN)     stride > 1 is handled by the wrapper
    _, H, W, TN = o_ref.shape
    C = x_ref.shape[-1]

    acc_ref[...] = jnp.zeros_like(acc_ref)
    # 3 deep-K matmuls (K = 3*C) accumulating into a VMEM f32 scratch.
    for kh in range(3):
        for kw in range(3):
            win = x_ref[0, kh:kh + H, kw:kw + W, :]          # (H, W, C)
            patch_ref[:, kw * C:(kw + 1) * C] = win.reshape(H * W, C)
        acc_ref[...] += jnp.dot(patch_ref[...], w_ref[kh],
                                preferred_element_type=jnp.float32)

    y = acc_ref[...] + b_ref[...]
    y = jnp.maximum(y, 0.0)
    o_ref[...] = y.reshape(o_ref.shape).astype(o_ref.dtype)


# ----------------------------------------------------------------------------
# pallas_call wrappers (tiled, pipelined)
# ----------------------------------------------------------------------------

def _matmul_fused(x2d, w, bias, identity=None, *, relu=True,
                  out_dtype=jnp.float32, tm=512):
    """Tiled (M, K) @ (K, N) + bias (+ identity) (+ ReLU)."""
    M, K = x2d.shape
    _, Nc = w.shape
    assert K % 128 == 0 and Nc % 128 == 0

    tm = min(tm, _round_up(M, 8))
    Mp = _round_up(M, tm)
    tn = 256 if Nc % 256 == 0 else 128

    if Mp != M:
        x2d = jnp.pad(x2d, ((0, Mp - M), (0, 0)))
        if identity is not None:
            identity = jnp.pad(identity, ((0, Mp - M), (0, 0)))

    bias2d = bias.reshape(1, Nc).astype(jnp.float32)
    grid = (Mp // tm, Nc // tn)

    in_specs = [
        pl.BlockSpec((tm, K), lambda i, j: (i, 0)),
        pl.BlockSpec((K, tn), lambda i, j: (0, j)),
        pl.BlockSpec((1, tn), lambda i, j: (0, j)),
    ]
    args = [x2d, w, bias2d]
    if identity is not None:
        in_specs.append(pl.BlockSpec((tm, tn), lambda i, j: (i, j)))
        args.append(identity)
        kernel = _mm_bias_add_relu_kernel
    else:
        kernel = functools.partial(_mm_bias_act_kernel, relu=relu)

    flops = 2 * Mp * K * Nc
    bytes_accessed = (Mp * K * x2d.dtype.itemsize
                      + K * Nc * w.dtype.itemsize
                      + Mp * Nc * jnp.dtype(out_dtype).itemsize)
    if identity is not None:
        bytes_accessed += Mp * Nc * identity.dtype.itemsize

    out = pl.pallas_call(
        kernel,
        out_shape=jax.ShapeDtypeStruct((Mp, Nc), out_dtype),
        grid=grid,
        in_specs=in_specs,
        out_specs=pl.BlockSpec((tm, tn), lambda i, j: (i, j)),
        compiler_params=pltpu.CompilerParams(
            dimension_semantics=("parallel", "parallel"),
            vmem_limit_bytes=_VMEM_LIMIT),
        cost_estimate=pl.CostEstimate(flops=flops, transcendentals=0,
                                      bytes_accessed=bytes_accessed),
    )(*args)
    return out[:M]


def _conv3x3_fused(x_nhwc, w_kh, bias, *, stride, out_dtype):
    """3x3 conv (pad=1) + bias + ReLU.  x_nhwc: (N,H,W,C), w_kh: (3, 3*C, Co)."""
    N, H, W, C = x_nhwc.shape
    _, K3, Co = w_kh.shape
    assert K3 == 3 * C and C % 128 == 0 and Co % 128 == 0
    assert W % 8 == 0, "W must be a multiple of 8 for sublane-clean reshapes"

    # Cheap wrapper-side 1-pixel halo (keeps all in-kernel slices simple loads).
    x_pad = jnp.pad(x_nhwc, ((0, 0), (1, 1), (1, 1), (0, 0)))

    tn = 256 if Co % 256 == 0 else 128
    grid = (N, Co // tn)
    bias2d = bias.reshape(1, Co).astype(jnp.float32)

    flops = 2 * N * H * W * 3 * K3 * Co
    bytes_accessed = (N * (H + 2) * (W + 2) * C * x_nhwc.dtype.itemsize
                      + 3 * K3 * Co * w_kh.dtype.itemsize
                      + N * H * W * Co * jnp.dtype(out_dtype).itemsize)

    out = pl.pallas_call(
        _conv3x3_kernel,
        out_shape=jax.ShapeDtypeStruct((N, H, W, Co), out_dtype),
        grid=grid,
        in_specs=[
            pl.BlockSpec((1, H + 2, W + 2, C), lambda n, j: (n, 0, 0, 0)),
            pl.BlockSpec((3, K3, tn), lambda n, j: (0, 0, j)),
            pl.BlockSpec((1, tn), lambda n, j: (0, j)),
        ],
        out_specs=pl.BlockSpec((1, H, W, tn), lambda n, j: (n, 0, 0, j)),
        scratch_shapes=[
            pltpu.VMEM((H * W, 3 * C), x_nhwc.dtype),    # deep-K patch
            pltpu.VMEM((H * W, tn), jnp.float32),        # accumulator
        ],
        compiler_params=pltpu.CompilerParams(
            dimension_semantics=("parallel", "parallel"),
            vmem_limit_bytes=_VMEM_LIMIT),
        cost_estimate=pl.CostEstimate(flops=flops, transcendentals=0,
                                      bytes_accessed=bytes_accessed),
    )(x_pad, w_kh, bias2d)

    if stride > 1:
        out = out[:, ::stride, ::stride, :]
    return out


# ----------------------------------------------------------------------------
# Bottleneck forward (wrapper)
# ----------------------------------------------------------------------------

def bottleneck_forward(x_nchw, params, stride=1, eps=1e-5,
                       compute_dtype=jnp.bfloat16):
    """x_nchw: (N, Cin, H, W) f32 -> (N, 4*planes, Ho, Wo) f32."""
    N, Cin, H, W = x_nchw.shape
    width = params["conv1_w"].shape[0]
    cout = params["conv3_w"].shape[0]
    has_ds = "ds_conv_w" in params
    if not has_ds:
        assert stride == 1 and Cin == cout, (
            "identity residual path requires stride=1 and inplanes == 4*planes; "
            "pass downsample (ds_*) params otherwise")

    Cin_p = _round_up(Cin, 128)
    Wd_p = _round_up(width, 128)
    Co_p = _round_up(cout, 128)

    x = jnp.transpose(x_nchw, (0, 2, 3, 1))          # NHWC
    x = _pad_axis(x, 3, Cin_p)

    # ---- fold BN (inference mode) into weights + bias ----------------------
    s1, b1 = _fold_bn(params["bn1_g"], params["bn1_b"], params["bn1_m"], params["bn1_v"], eps)
    s2, b2 = _fold_bn(params["bn2_g"], params["bn2_b"], params["bn2_m"], params["bn2_v"], eps)
    s3, b3 = _fold_bn(params["bn3_g"], params["bn3_b"], params["bn3_m"], params["bn3_v"], eps)

    w1 = jnp.transpose(params["conv1_w"][:, :, 0, 0], (1, 0)) * s1[None, :]        # (Cin, width)
    w1 = _pad_axis(_pad_axis(w1, 0, Cin_p), 1, Wd_p).astype(compute_dtype)
    b1p = _pad_axis(b1, 0, Wd_p)

    w2 = jnp.transpose(params["conv2_w"], (2, 3, 1, 0)) * s2[None, None, None, :]  # (3,3,cin,cout)
    w2 = _pad_axis(_pad_axis(w2, 2, Wd_p), 3, Wd_p)
    w2 = w2.reshape(3, 3 * Wd_p, Wd_p).astype(compute_dtype)                       # kw folded into K
    b2p = _pad_axis(b2, 0, Wd_p)

    w3 = jnp.transpose(params["conv3_w"][:, :, 0, 0], (1, 0)) * s3[None, :]        # (width, cout)
    w3 = _pad_axis(_pad_axis(w3, 0, Wd_p), 1, Co_p).astype(compute_dtype)
    b3p = _pad_axis(b3, 0, Co_p)

    Ho = (H - 1) // stride + 1
    Wo = (W - 1) // stride + 1

    # ---- stage 1: conv1 (1x1) + BN + ReLU ---------------------------------
    x2d = x.reshape(N * H * W, Cin_p).astype(compute_dtype)
    out1 = _matmul_fused(x2d, w1, b1p, relu=True, out_dtype=compute_dtype)
    out1 = out1.reshape(N, H, W, Wd_p)

    # ---- stage 2: conv2 (3x3, pad=1, stride) + BN + ReLU ------------------
    out2 = _conv3x3_fused(out1, w2, b2p, stride=stride, out_dtype=compute_dtype)
    out2_2d = out2.reshape(N * Ho * Wo, Wd_p)

    # ---- residual branch ---------------------------------------------------
    if has_ds:
        sd, bd = _fold_bn(params["ds_bn_g"], params["ds_bn_b"],
                          params["ds_bn_m"], params["ds_bn_v"], eps)
        wd = jnp.transpose(params["ds_conv_w"][:, :, 0, 0], (1, 0)) * sd[None, :]  # (Cin, cout)
        wd = _pad_axis(_pad_axis(wd, 0, Cin_p), 1, Co_p).astype(compute_dtype)
        bdp = _pad_axis(bd, 0, Co_p)
        x_ds = x[:, ::stride, ::stride, :].reshape(N * Ho * Wo, Cin_p).astype(compute_dtype)
        identity = _matmul_fused(x_ds, wd, bdp, relu=False, out_dtype=jnp.float32)
    else:
        identity = x.reshape(N * H * W, Cin_p).astype(jnp.float32)   # Cin_p == Co_p here

    # ---- stage 3: conv3 (1x1) + BN + residual add + ReLU ------------------
    out3 = _matmul_fused(out2_2d, w3, b3p, identity=identity,
                         relu=True, out_dtype=jnp.float32)

    out = out3[:, :cout].reshape(N, Ho, Wo, cout)
    return jnp.transpose(out, (0, 3, 1, 2))          # back to NCHW


# ----------------------------------------------------------------------------
# Deterministic params + pure-JAX reference
# ----------------------------------------------------------------------------

def make_params(key, inplanes, planes, with_downsample=False):
    width = planes                 # base_width=64, groups=1 -> width = planes
    cout = planes * 4
    ks = jax.random.split(key, 24)

    def bn(i, c):
        return (1.0 + 0.1 * jax.random.normal(ks[i], (c,), jnp.float32),
                0.1 * jax.random.normal(ks[i + 1], (c,), jnp.float32),
                0.1 * jax.random.normal(ks[i + 2], (c,), jnp.float32),
                1.0 + 0.1 * jax.random.uniform(ks[i + 3], (c,), jnp.float32))

    p = {
        "conv1_w": 0.1 * jax.random.normal(ks[0], (width, inplanes, 1, 1), jnp.float32),
        "conv2_w": 0.1 * jax.random.normal(ks[1], (width, width, 3, 3), jnp.float32),
        "conv3_w": 0.1 * jax.random.normal(ks[2], (cout, width, 1, 1), jnp.float32),
    }
    for name, i, c in (("bn1", 4, width), ("bn2", 8, width), ("bn3", 12, cout)):
        g, b, m, v = bn(i, c)
        p[f"{name}_g"], p[f"{name}_b"], p[f"{name}_m"], p[f"{name}_v"] = g, b, m, v
    if with_downsample:
        p["ds_conv_w"] = 0.1 * jax.random.normal(ks[3], (cout, inplanes, 1, 1), jnp.float32)
        g, b, m, v = bn(16, cout)
        p["ds_bn_g"], p["ds_bn_b"], p["ds_bn_m"], p["ds_bn_v"] = g, b, m, v
    return p


def reference_forward(x_nchw, params, stride=1, eps=1e-5):
    prec = jax.lax.Precision.HIGHEST

    def bn(y, g, b, m, v):
        return ((y - m[None, :, None, None]) / jnp.sqrt(v[None, :, None, None] + eps)
                * g[None, :, None, None] + b[None, :, None, None])

    dn = jax.lax.conv_dimension_numbers(x_nchw.shape, params["conv1_w"].shape,
                                        ("NCHW", "OIHW", "NCHW"))
    out = jax.lax.conv_general_dilated(x_nchw, params["conv1_w"], (1, 1), "VALID",
                                       dimension_numbers=dn, precision=prec)
    out = jax.nn.relu(bn(out, params["bn1_g"], params["bn1_b"],
                         params["bn1_m"], params["bn1_v"]))
    out = jax.lax.conv_general_dilated(out, params["conv2_w"], (stride, stride),
                                       ((1, 1), (1, 1)), dimension_numbers=dn,
                                       precision=prec)
    out = jax.nn.relu(bn(out, params["bn2_g"], params["bn2_b"],
                         params["bn2_m"], params["bn2_v"]))
    out = jax.lax.conv_general_dilated(out, params["conv3_w"], (1, 1), "VALID",
                                       dimension_numbers=dn, precision=prec)
    out = bn(out, params["bn3_g"], params["bn3_b"],
             params["bn3_m"], params["bn3_v"])
    if "ds_conv_w" in params:
        identity = jax.lax.conv_general_dilated(x_nchw, params["ds_conv_w"],
                                                (stride, stride), "VALID",
                                                dimension_numbers=dn, precision=prec)
        identity = bn(identity, params["ds_bn_g"], params["ds_bn_b"],
                      params["ds_bn_m"], params["ds_bn_v"])
    else:
        identity = x_nchw
    return jax.nn.relu(out + identity)


if __name__ == "__main__":
    key = jax.random.PRNGKey(0)
    k_x1, k_p1, k_x2, k_p2 = jax.random.split(key, 4)

    # ---- config 1: identity residual path (stride=1, inplanes == 4*planes) ----
    N, inplanes, Hs, Ws, planes = 2, 16, 16, 16, 4
    x1 = jax.random.normal(k_x1, (N, inplanes, Hs, Ws), jnp.float32)
    p1 = make_params(k_p1, inplanes, planes)

    out_f32 = jax.block_until_ready(
        bottleneck_forward(x1, p1, stride=1, compute_dtype=jnp.float32))
    ref1 = jax.block_until_ready(reference_forward(x1, p1, stride=1))
    assert out_f32.shape == (N, planes * 4, Hs, Ws), out_f32.shape
    err1 = float(jnp.max(jnp.abs(out_f32 - ref1)))
    assert jnp.allclose(out_f32, ref1, atol=3e-2, rtol=3e-2), err1

    # bf16 MXU operands (v6e/v7x fast path), f32 epilogue — looser tolerance.
    out_bf16 = jax.block_until_ready(
        bottleneck_forward(x1, p1, stride=1, compute_dtype=jnp.bfloat16))
    err1b = float(jnp.max(jnp.abs(out_bf16 - ref1)))
    assert jnp.allclose(out_bf16, ref1, atol=0.2, rtol=0.1), err1b

    # ---- config 2: downsample branch (stride=2, inplanes != 4*planes) ---------
    N2, inplanes2, planes2 = 2, 8, 4
    x2 = jax.random.normal(k_x2, (N2, inplanes2, Hs, Ws), jnp.float32)
    p2 = make_params(k_p2, inplanes2, planes2, with_downsample=True)

    out_ds = jax.block_until_ready(
        bottleneck_forward(x2, p2, stride=2, compute_dtype=jnp.float32))
    ref2 = jax.block_until_ready(reference_forward(x2, p2, stride=2))
    assert out_ds.shape == (N2, planes2 * 4, Hs // 2, Ws // 2), out_ds.shape
    err2 = float(jnp.max(jnp.abs(out_ds - ref2)))
    assert jnp.allclose(out_ds, ref2, atol=3e-2, rtol=3e-2), err2

    print("KERNEL_OK")
</pallas_src>

<mosaic_0001>
module attributes {stable_mosaic.version = 11 : i64} {
  func.func @_mm_bias_act_kernel(%arg0: i32, %arg1: i32, %arg2: memref<512x128xf32, #tpu.memory_space<vmem>>, %arg3: memref<128x128xf32, #tpu.memory_space<vmem>>, %arg4: memref<1x128xf32, #tpu.memory_space<vmem>>, %arg5: memref<512x128xf32, #tpu.memory_space<vmem>>) attributes {dimension_semantics = [#tpu.dimension_semantics<parallel>, #tpu.dimension_semantics<parallel>], iteration_bounds = array<i64: 1, 1>, scalar_prefetch = 0 : i64, scratch_operands = 0 : i64, tpu.core_type = #tpu.core_type<tc>, window_params = [{transform_indices = @transform_0, window_bounds = array<i64: 512, 128>}, {transform_indices = @transform_1, window_bounds = array<i64: 128, 128>}, {transform_indices = @transform_2, window_bounds = array<i64: 1, 128>}, {transform_indices = @transform_3, window_bounds = array<i64: 512, 128>}]} {
    %c0 = arith.constant 0 : index
    %c0_0 = arith.constant 0 : index
    %0 = vector.load %arg2[%c0, %c0_0] : memref<512x128xf32, #tpu.memory_space<vmem>>, vector<512x128xf32>
    %c0_1 = arith.constant 0 : index
    %c0_2 = arith.constant 0 : index
    %1 = vector.load %arg3[%c0_1, %c0_2] : memref<128x128xf32, #tpu.memory_space<vmem>>, vector<128x128xf32>
    %cst = arith.constant dense<0.000000e+00> : vector<512x128xf32>
    %2 = tpu.matmul %0, %1, %cst {dimension_numbers = #tpu.dot_dimension_numbers<[1], [0], [0], [1], [0, 0, 1, 1], [], []>} : vector<512x128xf32>, vector<128x128xf32>, vector<512x128xf32> -> vector<512x128xf32>
    %c0_3 = arith.constant 0 : index
    %c0_4 = arith.constant 0 : index
    %3 = vector.load %arg4[%c0_3, %c0_4] : memref<1x128xf32, #tpu.memory_space<vmem>>, vector<1x128xf32>
    %4 = vector.broadcast %3 : vector<1x128xf32> to vector<512x128xf32>
    %5 = arith.addf %2, %4 : vector<512x128xf32>
    %cst_5 = arith.constant 0.000000e+00 : f32
    %6 = vector.broadcast %cst_5 : f32 to vector<512x128xf32>
    %7 = arith.maximumf %5, %6 : vector<512x128xf32>
    %c0_6 = arith.constant 0 : index
    %c0_7 = arith.constant 0 : index
    %8 = vector.load %arg5[%c0_6, %c0_7] : memref<512x128xf32, #tpu.memory_space<vmem>>, vector<512x128xf32>
    tpu.vector_store %arg5[%c0_6, %c0_7], %7 {strides = array<i32>} : memref<512x128xf32, #tpu.memory_space<vmem>>, vector<512x128xf32>,
    return
  }
  func.func @transform_0(%arg0: i32, %arg1: i32) -> (i32, i32) {
    %c0_i32 = arith.constant 0 : i32
    %c0_i32_0 = arith.constant 0 : i32
    return %arg0, %c0_i32 : i32, i32
  }
  func.func @transform_1(%arg0: i32, %arg1: i32) -> (i32, i32) {
    %c0_i32 = arith.constant 0 : i32
    %c0_i32_0 = arith.constant 0 : i32
    return %c0_i32, %arg1 : i32, i32
  }
  func.func @transform_2(%arg0: i32, %arg1: i32) -> (i32, i32) {
    %c0_i32 = arith.constant 0 : i32
    %c0_i32_0 = arith.constant 0 : i32
    return %c0_i32, %arg1 : i32, i32
  }
  func.func @transform_3(%arg0: i32, %arg1: i32) -> (i32, i32) {
    %c0_i32 = arith.constant 0 : i32
    return %arg0, %arg1 : i32, i32
  }
}

</mosaic_0001>

<llo_original>
// kernel: tpu_custom_call.1
$region0: #{tpu_custom_call.1}
  #allocation0 [shape = 'u32[]', space=smem, size = 0x4, offset = 0x4, fixed_abs, tag = 'smem constant byte address 0x4 - core index']
  #allocation1 [shape = 'u32[144,128]{1,0:T(1,128)}', space=vmem, size = 0x12000, scoped, tag = 'internal scratch']
  %s0 = inlined_call_operand.hbm [shape: f32[512,128], index: 0, kind: input, shape index: {}]
  %s1 = inlined_call_operand.hbm [shape: f32[128,128], index: 1, kind: input, shape index: {}]
  %s2 = inlined_call_operand.vmem [shape: f32[1,128], index: 2, kind: input, shape index: {}]
  %s3 = inlined_call_operand.hbm [shape: f32[512,128], index: 3, kind: output, shape index: {}]
  %s4 = sld [smem:[#allocation0]]
  $region30: #{tpu_custom_call.1} parent=0
    _
  %s6 = ssub.s32 1, %s4
  %s7 = scalar_select 0, %s6, %s4
  $region1: #{tpu_custom_call.1} parent=0
    #allocation2 [shape = 'u8[262144]{0}', space=vmem, size = 0x40000, scoped, tag = 'input window, operand 0, single buffered']
    #allocation3 [shape = 's32[1]{0}', space=sflag, size = 0x4, scoped, tag = 'scoped memory for tpu_custom_call.1']
    #allocation4 [shape = 's32[1]{0}', space=sflag, size = 0x4, scoped, tag = 'scoped memory for tpu_custom_call.1']
    #allocation5 [shape = 'u8[65536]{0}', space=vmem, size = 0x10000, scoped, tag = 'input window, operand 1, single buffered']
    #allocation6 [shape = 's32[1]{0}', space=sflag, size = 0x4, scoped, tag = 'scoped memory for tpu_custom_call.1']
    #allocation7 [shape = 'u8[262144]{0}', space=vmem, size = 0x40000, scoped, tag = 'output window, operand 0, single buffered']
    %8 = vsyncpa [#allocation3], 0
    %9 = vsyncpa [#allocation6], 0
    %10 = vsyncpa [#allocation4], 0
    // Predicated region
    $region2: #{tpu_custom_call.1} parent=1 // pred_check
      _
    $region3: #{tpu_custom_call.1} parent=1 // pred_check_branch
      %12 = sbr.rel (0) target = $region5
    $region4: #{tpu_custom_call.1} parent=1 // pred_region
      %s14 = ssub.s32 8192, 8192
      %15 = vsyncadd [#allocation3], %s14
      %s16 = sshll.u32 [#allocation2], 4
      %s17 = int_to_ptr.vmem [resolvable:$true] %s16
      %22 = dma.hbm_to_vmem [thread:$0]  %s0, 8192, %s17, [#allocation3], 128, 128, 8
    $region5: #{tpu_custom_call.1} parent=1 // pred_fallthru
      _
    // Predicated region
    $region6: #{tpu_custom_call.1} parent=1 // pred_check
      _
    $region7: #{tpu_custom_call.1} parent=1 // pred_check_branch
      %24 = sbr.rel (0) target = $region9
    $region8: #{tpu_custom_call.1} parent=1 // pred_region
      %s26 = ssub.s32 2048, 2048
      %27 = vsyncadd [#allocation6], %s26
      %s28 = sshll.u32 [#allocation5], 4
      %s29 = int_to_ptr.vmem [resolvable:$true] %s28
      %34 = dma.hbm_to_vmem [thread:$0]  %s1, 2048, %s29, [#allocation6], 128, 128, 8
    $region9: #{tpu_custom_call.1} parent=1 // pred_fallthru
      _
    // Predicated region
    $region10: #{tpu_custom_call.1} parent=1 // pred_check
      _
    $region11: #{tpu_custom_call.1} parent=1 // pred_check_branch
      %36 = sbr.rel (0) target = $region13
    $region12: #{tpu_custom_call.1} parent=1 // pred_region
      _
    $region13: #{tpu_custom_call.1} parent=1 // pred_fallthru
      _
    // Predicated region
    $region14: #{tpu_custom_call.1} parent=1 // pred_check
      _
    $region15: #{tpu_custom_call.1} parent=1 // pred_check_branch
      %38 = sbr.rel (0) target = $region17
    $region16: #{tpu_custom_call.1} parent=1 // pred_region
      %39 = dma.done [#allocation3], 8192
    $region17: #{tpu_custom_call.1} parent=1 // pred_fallthru
      _
    // Predicated region
    $region18: #{tpu_custom_call.1} parent=1 // pred_check
      _
    $region19: #{tpu_custom_call.1} parent=1 // pred_check_branch
      %41 = sbr.rel (0) target = $region21
    $region20: #{tpu_custom_call.1} parent=1 // pred_region
      %42 = dma.done [#allocation6], 2048
    $region21: #{tpu_custom_call.1} parent=1 // pred_fallthru
      _
    %v43 = vld [vmem:[#allocation2] sm:$0xff]
    %v44 = vld [vmem:[#allocation2 + $0x8] sm:$0xff]
    %v45 = vld [vmem:[#allocation2 + $0x10] sm:$0xff]
    %v46 = vld [vmem:[#allocation2 + $0x18] sm:$0xff]
    %v47 = vld [vmem:[#allocation2 + $0x20] sm:$0xff]
    %v48 = vld [vmem:[#allocation2 + $0x28] sm:$0xff]
    %v49 = vld [vmem:[#allocation2 + $0x30] sm:$0xff]
    %v50 = vld [vmem:[#allocation2 + $0x38] sm:$0xff]
    %v51 = vld [vmem:[#allocation2 + $0x40] sm:$0xff]
    %v52 = vld [vmem:[#allocation2 + $0x48] sm:$0xff]
    %v53 = vld [vmem:[#allocation2 + $0x50] sm:$0xff]
    %v54 = vld [vmem:[#allocation2 + $0x58] sm:$0xff]
    %v55 = vld [vmem:[#allocation2 + $0x60] sm:$0xff]
    %v56 = vld [vmem:[#allocation2 + $0x68] sm:$0xff]
    %v57 = vld [vmem:[#allocation2 + $0x70] sm:$0xff]
    %v58 = vld [vmem:[#allocation2 + $0x78] sm:$0xff]
    %v59 = vld [vmem:[#allocation2 + $0x80] sm:$0xff]
    %v60 = vld [vmem:[#allocation2 + $0x88] sm:$0xff]
    %v61 = vld [vmem:[#allocation2 + $0x90] sm:$0xff]
    %v62 = vld [vmem:[#allocation2 + $0x98] sm:$0xff]
    %v63 = vld [vmem:[#allocation2 + $0xa0] sm:$0xff]
    %v64 = vld [vmem:[#allocation2 + $0xa8] sm:$0xff]
    %v65 = vld [vmem:[#allocation2 + $0xb0] sm:$0xff]
    %v66 = vld [vmem:[#allocation2 + $0xb8] sm:$0xff]
    %v67 = vld [vmem:[#allocation2 + $0xc0] sm:$0xff]
    %v68 = vld [vmem:[#allocation2 + $0xc8] sm:$0xff]
    %v69 = vld [vmem:[#allocation2 + $0xd0] sm:$0xff]
    %v70 = vld [vmem:[#allocation2 + $0xd8] sm:$0xff]
    %v71 = vld [vmem:[#allocation2 + $0xe0] sm:$0xff]
    %v72 = vld [vmem:[#allocation2 + $0xe8] sm:$0xff]
    %v73 = vld [vmem:[#allocation2 + $0xf0] sm:$0xff]
    %v74 = vld [vmem:[#allocation2 + $0xf8] sm:$0xff]
    %v75 = vld [vmem:[#allocation2 + $0x100] sm:$0xff]
    %v76 = vld [vmem:[#allocation2 + $0x108] sm:$0xff]
    %v77 = vld [vmem:[#allocation2 + $0x110] sm:$0xff]
    %v78 = vld [vmem:[#allocation2 + $0x118] sm:$0xff]
    %v79 = vld [vmem:[#allocation2 + $0x120] sm:$0xff]
    %v80 = vld [vmem:[#allocation2 + $0x128] sm:$0xff]
    %v81 = vld [vmem:[#allocation2 + $0x130] sm:$0xff]
    %v82 = vld [vmem:[#allocation2 + $0x138] sm:$0xff]
    %v83 = vld [vmem:[#allocation2 + $0x140] sm:$0xff]
    %v84 = vld [vmem:[#allocation2 + $0x148] sm:$0xff]
    %v85 = vld [vmem:[#allocation2 + $0x150] sm:$0xff]
    %v86 = vld [vmem:[#allocation2 + $0x158] sm:$0xff]
    %v87 = vld [vmem:[#allocation2 + $0x160] sm:$0xff]
    %v88 = vld [vmem:[#allocation2 + $0x168] sm:$0xff]
    %v89 = vld [vmem:[#allocation2 + $0x170] sm:$0xff]
    %v90 = vld [vmem:[#allocation2 + $0x178] sm:$0xff]
    %v91 = vld [vmem:[#allocation2 + $0x180] sm:$0xff]
    %v92 = vld [vmem:[#allocation2 + $0x188] sm:$0xff]
    %v93 = vld [vmem:[#allocation2 + $0x190] sm:$0xff]
    %v94 = vld [vmem:[#allocation2 + $0x198] sm:$0xff]
    %v95 = vld [vmem:[#allocation2 + $0x1a0] sm:$0xff]
    %v96 = vld [vmem:[#allocation2 + $0x1a8] sm:$0xff]
    %v97 = vld [vmem:[#allocation2 + $0x1b0] sm:$0xff]
    %v98 = vld [vmem:[#allocation2 + $0x1b8] sm:$0xff]
    %v99 = vld [vmem:[#allocation2 + $0x1c0] sm:$0xff]
    %v100 = vld [vmem:[#allocation2 + $0x1c8] sm:$0xff]
    %v101 = vld [vmem:[#allocation2 + $0x1d0] sm:$0xff]
    %v102 = vld [vmem:[#allocation2 + $0x1d8] sm:$0xff]
    %v103 = vld [vmem:[#allocation2 + $0x1e0] sm:$0xff]
    %v104 = vld [vmem:[#allocation2 + $0x1e8] sm:$0xff]
    %v105 = vld [vmem:[#allocation2 + $0x1f0] sm:$0xff]
    %v106 = vld [vmem:[#allocation2 + $0x1f8] sm:$0xff]
    %v107 = vld [vmem:[#allocation5] sm:$0xff]
    %v108 = vld [vmem:[#allocation5 + $0x8] sm:$0xff]
    %v109 = vld [vmem:[#allocation5 + $0x10] sm:$0xff]
    %v110 = vld [vmem:[#allocation5 + $0x18] sm:$0xff]
    %v111 = vld [vmem:[#allocation5 + $0x20] sm:$0xff]
    %v112 = vld [vmem:[#allocation5 + $0x28] sm:$0xff]
    %v113 = vld [vmem:[#allocation5 + $0x30] sm:$0xff]
    %v114 = vld [vmem:[#allocation5 + $0x38] sm:$0xff]
    %v115 = vld [vmem:[#allocation5 + $0x40] sm:$0xff]
    %v116 = vld [vmem:[#allocation5 + $0x48] sm:$0xff]
    %v117 = vld [vmem:[#allocation5 + $0x50] sm:$0xff]
    %v118 = vld [vmem:[#allocation5 + $0x58] sm:$0xff]
    %v119 = vld [vmem:[#allocation5 + $0x60] sm:$0xff]
    %v120 = vld [vmem:[#allocation5 + $0x68] sm:$0xff]
    %v121 = vld [vmem:[#allocation5 + $0x70] sm:$0xff]
    %v122 = vld [vmem:[#allocation5 + $0x78] sm:$0xff]
    %v123 = vld [vmem:[%s2] sm:$0x1]
    %v125 = vlaneseq
    %v126 = vshrl.u32 %v125, 7
    %v127 = vsub.s32 0, %v126
    %v128 = vrot.slane %v123, %v127
    %130 = vmatprep.subr.mxu0 0.0
    %131 = vmatpush1.msra.mxu0 %v122
    %132 = vmatprep.subr.mxu0 0.0
    %133 = vmatpush1.msra.mxu0 %v121
    %134 = vmatprep.subr.mxu0 0.0
    %135 = vmatpush1.msra.mxu0 %v120
    %136 = vmatprep.subr.mxu0 0.0
    %137 = vmatpush1.msra.mxu0 %v119
    %138 = vmatprep.subr.mxu0 0.0
    %139 = vmatpush1.msra.mxu0 %v118
    %140 = vmatprep.subr.mxu0 0.0
    %141 = vmatpush1.msra.mxu0 %v117
    %142 = vmatprep.subr.mxu0 0.0
    %143 = vmatpush1.msra.mxu0 %v116
    %144 = vmatprep.subr.mxu0 0.0
    %145 = vmatpush1.msra.mxu0 %v115
    %146 = vmatprep.subr.mxu0 0.0
    %147 = vmatpush1.msra.mxu0 %v114
    %148 = vmatprep.subr.mxu0 0.0
    %149 = vmatpush1.msra.mxu0 %v113
    %150 = vmatprep.subr.mxu0 0.0
    %151 = vmatpush1.msra.mxu0 %v112
    %152 = vmatprep.subr.mxu0 0.0
    %153 = vmatpush1.msra.mxu0 %v111
    %154 = vmatprep.subr.mxu0 0.0
    %155 = vmatpush1.msra.mxu0 %v110
    %156 = vmatprep.subr.mxu0 0.0
    %157 = vmatpush1.msra.mxu0 %v109
    %158 = vmatprep.subr.mxu0 0.0
    %159 = vmatpush1.msra.mxu0 %v108
    %160 = vmatprep.subr.mxu0 0.0
    %161 = vmatpush1.msra.mxu0 %v107
    %162 = vmatprep.subr.mxu0 0.0
    %163 = vmatpush2.msra.mxu0 0.0
    %164 = vmatprep.subr.mxu0 0.0
    %165 = vmatpush2.msra.mxu0 0.0
    %166 = vmatprep.subr.mxu0 0.0
    %167 = vmatpush2.msra.mxu0 0.0
    %168 = vmatprep.subr.mxu0 0.0
    %169 = vmatpush2.msra.mxu0 0.0
    %170 = vmatprep.subr.mxu0 0.0
    %171 = vmatpush2.msra.mxu0 0.0
    %172 = vmatprep.subr.mxu0 0.0
    %173 = vmatpush2.msra.mxu0 0.0
    %174 = vmatprep.subr.mxu0 0.0
    %175 = vmatpush2.msra.mxu0 0.0
    %176 = vmatprep.subr.mxu0 0.0
    %177 = vmatpush2.msra.mxu0 0.0
    %178 = vmatprep.subr.mxu0 0.0
    %179 = vmatpush2.msra.mxu0 0.0
    %180 = vmatprep.subr.mxu0 0.0
    %181 = vmatpush2.msra.mxu0 0.0
    %182 = vmatprep.subr.mxu0 0.0
    %183 = vmatpush2.msra.mxu0 0.0
    %184 = vmatprep.subr.mxu0 0.0
    %185 = vmatpush2.msra.mxu0 0.0
    %186 = vmatprep.subr.mxu0 0.0
    %187 = vmatpush2.msra.mxu0 0.0
    %188 = vmatprep.subr.mxu0 0.0
    %189 = vmatpush2.msra.mxu0 0.0
    %190 = vmatprep.subr.mxu0 0.0
    %191 = vmatpush2.msra.mxu0 0.0
    %192 = vmatprep.subr.mxu0 0.0
    %193 = vmatpush2.msra.mxu0 0.0
    %194 = vmatprep.mubr.f32.mxu0 0.0
    %195 = vmatmul.mubr.f32.gmra.mxu0 %v43
    %v196 = vpop.f32.mrf.mxu0
    %v197 = vadd.f32 %v128, %v196
    %v198 = vpop.f32.mrf.mxu0
    %199 = vmatprep.mubr.f32.mxu0 0.0
    %200 = vmatmul.mubr.f32.gmra.mxu0 %v44
    %v201 = vpop.f32.mrf.mxu0
    %v202 = vadd.f32 %v128, %v201
    %v203 = vpop.f32.mrf.mxu0
    %204 = vmatprep.mubr.f32.mxu0 0.0
    %205 = vmatmul.mubr.f32.gmra.mxu0 %v45
    %v206 = vpop.f32.mrf.mxu0
    %v207 = vadd.f32 %v128, %v206
    %v208 = vpop.f32.mrf.mxu0
    %209 = vmatprep.mubr.f32.mxu0 0.0
    %210 = vmatmul.mubr.f32.gmra.mxu0 %v46
    %v211 = vpop.f32.mrf.mxu0
    %v212 = vadd.f32 %v128, %v211
    %v213 = vpop.f32.mrf.mxu0
    %214 = vmatprep.mubr.f32.mxu0 0.0
    %215 = vmatmul.mubr.f32.gmra.mxu0 %v47
    %v216 = vpop.f32.mrf.mxu0
    %v217 = vadd.f32 %v128, %v216
    %v218 = vpop.f32.mrf.mxu0
    %219 = vmatprep.mubr.f32.mxu0 0.0
    %220 = vmatmul.mubr.f32.gmra.mxu0 %v48
    %v221 = vpop.f32.mrf.mxu0
    %v222 = vadd.f32 %v128, %v221
    %v223 = vpop.f32.mrf.mxu0
    %224 = vmatprep.mubr.f32.mxu0 0.0
    %225 = vmatmul.mubr.f32.gmra.mxu0 %v49
    %v226 = vpop.f32.mrf.mxu0
    %v227 = vadd.f32 %v128, %v226
    %v228 = vpop.f32.mrf.mxu0
    %229 = vmatprep.mubr.f32.mxu0 0.0
    %230 = vmatmul.mubr.f32.gmra.mxu0 %v50
    %v231 = vpop.f32.mrf.mxu0
    %v232 = vadd.f32 %v128, %v231
    %v233 = vpop.f32.mrf.mxu0
    %234 = vmatprep.mubr.f32.mxu0 0.0
    %235 = vmatmul.mubr.f32.gmra.mxu0 %v51
    %v236 = vpop.f32.mrf.mxu0
    %v237 = vadd.f32 %v128, %v236
    %v238 = vpop.f32.mrf.mxu0
    %239 = vmatprep.mubr.f32.mxu0 0.0
    %240 = vmatmul.mubr.f32.gmra.mxu0 %v52
    %v241 = vpop.f32.mrf.mxu0
    %v242 = vadd.f32 %v128, %v241
    %v243 = vpop.f32.mrf.mxu0
    %244 = vmatprep.mubr.f32.mxu0 0.0
    %245 = vmatmul.mubr.f32.gmra.mxu0 %v53
    %v246 = vpop.f32.mrf.mxu0
    %v247 = vadd.f32 %v128, %v246
    %v248 = vpop.f32.mrf.mxu0
    %249 = vmatprep.mubr.f32.mxu0 0.0
    %250 = vmatmul.mubr.f32.gmra.mxu0 %v54
    %v251 = vpop.f32.mrf.mxu0
    %v252 = vadd.f32 %v128, %v251
    %v253 = vpop.f32.mrf.mxu0
    %254 = vmatprep.mubr.f32.mxu0 0.0
    %255 = vmatmul.mubr.f32.gmra.mxu0 %v55
    %v256 = vpop.f32.mrf.mxu0
    %v257 = vadd.f32 %v128, %v256
    %v258 = vpop.f32.mrf.mxu0
    %259 = vmatprep.mubr.f32.mxu0 0.0
    %260 = vmatmul.mubr.f32.gmra.mxu0 %v56
    %v261 = vpop.f32.mrf.mxu0
    %v262 = vadd.f32 %v128, %v261
    %v263 = vpop.f32.mrf.mxu0
    %264 = vmatprep.mubr.f32.mxu0 0.0
    %265 = vmatmul.mubr.f32.gmra.mxu0 %v57
    %v266 = vpop.f32.mrf.mxu0
    %v267 = vadd.f32 %v128, %v266
    %v268 = vpop.f32.mrf.mxu0
    %269 = vmatprep.mubr.f32.mxu0 0.0
    %270 = vmatmul.mubr.f32.gmra.mxu0 %v58
    %v271 = vpop.f32.mrf.mxu0
    %v272 = vadd.f32 %v128, %v271
    %v273 = vpop.f32.mrf.mxu0
    %274 = vmatprep.mubr.f32.mxu0 0.0
    %275 = vmatmul.mubr.f32.gmra.mxu0 %v59
    %v276 = vpop.f32.mrf.mxu0
    %v277 = vadd.f32 %v128, %v276
    %v278 = vpop.f32.mrf.mxu0
    %279 = vmatprep.mubr.f32.mxu0 0.0
    %280 = vmatmul.mubr.f32.gmra.mxu0 %v60
    %v281 = vpop.f32.mrf.mxu0
    %v282 = vadd.f32 %v128, %v281
    %v283 = vpop.f32.mrf.mxu0
    %284 = vmatprep.mubr.f32.mxu0 0.0
    %285 = vmatmul.mubr.f32.gmra.mxu0 %v61
    %v286 = vpop.f32.mrf.mxu0
    %v287 = vadd.f32 %v128, %v286
    %v288 = vpop.f32.mrf.mxu0
    %289 = vmatprep.mubr.f32.mxu0 0.0
    %290 = vmatmul.mubr.f32.gmra.mxu0 %v62
    %v291 = vpop.f32.mrf.mxu0
    %v292 = vadd.f32 %v128, %v291
    %v293 = vpop.f32.mrf.mxu0
    %294 = vmatprep.mubr.f32.mxu0 0.0
    %295 = vmatmul.mubr.f32.gmra.mxu0 %v63
    %v296 = vpop.f32.mrf.mxu0
    %v297 = vadd.f32 %v128, %v296
    %v298 = vpop.f32.mrf.mxu0
    %299 = vmatprep.mubr.f32.mxu0 0.0
    %300 = vmatmul.mubr.f32.gmra.mxu0 %v64
    %v301 = vpop.f32.mrf.mxu0
    %v302 = vadd.f32 %v128, %v301
    %v303 = vpop.f32.mrf.mxu0
    %304 = vmatprep.mubr.f32.mxu0 0.0
    %305 = vmatmul.mubr.f32.gmra.mxu0 %v65
    %v306 = vpop.f32.mrf.mxu0
    %v307 = vadd.f32 %v128, %v306
    %v308 = vpop.f32.mrf.mxu0
    %309 = vmatprep.mubr.f32.mxu0 0.0
    %310 = vmatmul.mubr.f32.gmra.mxu0 %v66
    %v311 = vpop.f32.mrf.mxu0
    %v312 = vadd.f32 %v128, %v311
    %v313 = vpop.f32.mrf.mxu0
    %314 = vmatprep.mubr.f32.mxu0 0.0
    %315 = vmatmul.mubr.f32.gmra.mxu0 %v67
    %v316 = vpop.f32.mrf.mxu0
    %v317 = vadd.f32 %v128, %v316
    %v318 = vpop.f32.mrf.mxu0
    %319 = vmatprep.mubr.f32.mxu0 0.0
    %320 = vmatmul.mubr.f32.gmra.mxu0 %v68
    %v321 = vpop.f32.mrf.mxu0
    %v322 = vadd.f32 %v128, %v321
    %v323 = vpop.f32.mrf.mxu0
    %324 = vmatprep.mubr.f32.mxu0 0.0
    %325 = vmatmul.mubr.f32.gmra.mxu0 %v69
    %v326 = vpop.f32.mrf.mxu0
    %v327 = vadd.f32 %v128, %v326
    %v328 = vpop.f32.mrf.mxu0
    %329 = vmatprep.mubr.f32.mxu0 0.0
    %330 = vmatmul.mubr.f32.gmra.mxu0 %v70
    %v331 = vpop.f32.mrf.mxu0
    %v332 = vadd.f32 %v128, %v331
    %v333 = vpop.f32.mrf.mxu0
    %334 = vmatprep.mubr.f32.mxu0 0.0
    %335 = vmatmul.mubr.f32.gmra.mxu0 %v71
    %v336 = vpop.f32.mrf.mxu0
    %v337 = vadd.f32 %v128, %v336
    %v338 = vpop.f32.mrf.mxu0
    %339 = vmatprep.mubr.f32.mxu0 0.0
    %340 = vmatmul.mubr.f32.gmra.mxu0 %v72
    %v341 = vpop.f32.mrf.mxu0
    %v342 = vadd.f32 %v128, %v341
    %v343 = vpop.f32.mrf.mxu0
    %344 = vmatprep.mubr.f32.mxu0 0.0
    %345 = vmatmul.mubr.f32.gmra.mxu0 %v73
    %v346 = vpop.f32.mrf.mxu0
    %v347 = vadd.f32 %v128, %v346
    %v348 = vpop.f32.mrf.mxu0
    %349 = vmatprep.mubr.f32.mxu0 0.0
    %350 = vmatmul.mubr.f32.gmra.mxu0 %v74
    %v351 = vpop.f32.mrf.mxu0
    %v352 = vadd.f32 %v128, %v351
    %v353 = vpop.f32.mrf.mxu0
    %354 = vmatprep.mubr.f32.mxu0 0.0
    %355 = vmatmul.mubr.f32.gmra.mxu0 %v75
    %v356 = vpop.f32.mrf.mxu0
    %v357 = vadd.f32 %v128, %v356
    %v358 = vpop.f32.mrf.mxu0
    %359 = vmatprep.mubr.f32.mxu0 0.0
    %360 = vmatmul.mubr.f32.gmra.mxu0 %v76
    %v361 = vpop.f32.mrf.mxu0
    %v362 = vadd.f32 %v128, %v361
    %v363 = vpop.f32.mrf.mxu0
    %364 = vmatprep.mubr.f32.mxu0 0.0
    %365 = vmatmul.mubr.f32.gmra.mxu0 %v77
    %v366 = vpop.f32.mrf.mxu0
    %v367 = vadd.f32 %v128, %v366
    %v368 = vpop.f32.mrf.mxu0
    %369 = vmatprep.mubr.f32.mxu0 0.0
    %370 = vmatmul.mubr.f32.gmra.mxu0 %v78
    %v371 = vpop.f32.mrf.mxu0
    %v372 = vadd.f32 %v128, %v371
    %v373 = vpop.f32.mrf.mxu0
    %374 = vmatprep.mubr.f32.mxu0 0.0
    %375 = vmatmul.mubr.f32.gmra.mxu0 %v79
    %v376 = vpop.f32.mrf.mxu0
    %v377 = vadd.f32 %v128, %v376
    %v378 = vpop.f32.mrf.mxu0
    %379 = vmatprep.mubr.f32.mxu0 0.0
    %380 = vmatmul.mubr.f32.gmra.mxu0 %v80
    %v381 = vpop.f32.mrf.mxu0
    %v382 = vadd.f32 %v128, %v381
    %v383 = vpop.f32.mrf.mxu0
    %384 = vmatprep.mubr.f32.mxu0 0.0
    %385 = vmatmul.mubr.f32.gmra.mxu0 %v81
    %v386 = vpop.f32.mrf.mxu0
    %v387 = vadd.f32 %v128, %v386
    %v388 = vpop.f32.mrf.mxu0
    %389 = vmatprep.mubr.f32.mxu0 0.0
    %390 = vmatmul.mubr.f32.gmra.mxu0 %v82
    %v391 = vpop.f32.mrf.mxu0
    %v392 = vadd.f32 %v128, %v391
    %v393 = vpop.f32.mrf.mxu0
    %394 = vmatprep.mubr.f32.mxu0 0.0
    %395 = vmatmul.mubr.f32.gmra.mxu0 %v83
    %v396 = vpop.f32.mrf.mxu0
    %v397 = vadd.f32 %v128, %v396
    %v398 = vpop.f32.mrf.mxu0
    %399 = vmatprep.mubr.f32.mxu0 0.0
    %400 = vmatmul.mubr.f32.gmra.mxu0 %v84
    %v401 = vpop.f32.mrf.mxu0
    %v402 = vadd.f32 %v128, %v401
    %v403 = vpop.f32.mrf.mxu0
    %404 = vmatprep.mubr.f32.mxu0 0.0
    %405 = vmatmul.mubr.f32.gmra.mxu0 %v85
    %v406 = vpop.f32.mrf.mxu0
    %v407 = vadd.f32 %v128, %v406
    %v408 = vpop.f32.mrf.mxu0
    %409 = vmatprep.mubr.f32.mxu0 0.0
    %410 = vmatmul.mubr.f32.gmra.mxu0 %v86
    %v411 = vpop.f32.mrf.mxu0
    %v412 = vadd.f32 %v128, %v411
    %v413 = vpop.f32.mrf.mxu0
    %414 = vmatprep.mubr.f32.mxu0 0.0
    %415 = vmatmul.mubr.f32.gmra.mxu0 %v87
    %v416 = vpop.f32.mrf.mxu0
    %v417 = vadd.f32 %v128, %v416
    %v418 = vpop.f32.mrf.mxu0
    %419 = vmatprep.mubr.f32.mxu0 0.0
    %420 = vmatmul.mubr.f32.gmra.mxu0 %v88
    %v421 = vpop.f32.mrf.mxu0
    %v422 = vadd.f32 %v128, %v421
    %v423 = vpop.f32.mrf.mxu0
    %424 = vmatprep.mubr.f32.mxu0 0.0
    %425 = vmatmul.mubr.f32.gmra.mxu0 %v89
    %v426 = vpop.f32.mrf.mxu0
    %v427 = vadd.f32 %v128, %v426
    %v428 = vpop.f32.mrf.mxu0
    %429 = vmatprep.mubr.f32.mxu0 0.0
    %430 = vmatmul.mubr.f32.gmra.mxu0 %v90
    %v431 = vpop.f32.mrf.mxu0
    %v432 = vadd.f32 %v128, %v431
    %v433 = vpop.f32.mrf.mxu0
    %434 = vmatprep.mubr.f32.mxu0 0.0
    %435 = vmatmul.mubr.f32.gmra.mxu0 %v91
    %v436 = vpop.f32.mrf.mxu0
    %v437 = vadd.f32 %v128, %v436
    %v438 = vpop.f32.mrf.mxu0
    %439 = vmatprep.mubr.f32.mxu0 0.0
    %440 = vmatmul.mubr.f32.gmra.mxu0 %v92
    %v441 = vpop.f32.mrf.mxu0
    %v442 = vadd.f32 %v128, %v441
    %v443 = vpop.f32.mrf.mxu0
    %444 = vmatprep.mubr.f32.mxu0 0.0
    %445 = vmatmul.mubr.f32.gmra.mxu0 %v93
    %v446 = vpop.f32.mrf.mxu0
    %v447 = vadd.f32 %v128, %v446
    %v448 = vpop.f32.mrf.mxu0
    %449 = vmatprep.mubr.f32.mxu0 0.0
    %450 = vmatmul.mubr.f32.gmra.mxu0 %v94
    %v451 = vpop.f32.mrf.mxu0
    %v452 = vadd.f32 %v128, %v451
    %v453 = vpop.f32.mrf.mxu0
    %454 = vmatprep.mubr.f32.mxu0 0.0
    %455 = vmatmul.mubr.f32.gmra.mxu0 %v95
    %v456 = vpop.f32.mrf.mxu0
    %v457 = vadd.f32 %v128, %v456
    %v458 = vpop.f32.mrf.mxu0
    %459 = vmatprep.mubr.f32.mxu0 0.0
    %460 = vmatmul.mubr.f32.gmra.mxu0 %v96
    %v461 = vpop.f32.mrf.mxu0
    %v462 = vadd.f32 %v128, %v461
    %v463 = vpop.f32.mrf.mxu0
    %464 = vmatprep.mubr.f32.mxu0 0.0
    %465 = vmatmul.mubr.f32.gmra.mxu0 %v97
    %v466 = vpop.f32.mrf.mxu0
    %v467 = vadd.f32 %v128, %v466
    %v468 = vpop.f32.mrf.mxu0
    %469 = vmatprep.mubr.f32.mxu0 0.0
    %470 = vmatmul.mubr.f32.gmra.mxu0 %v98
    %v471 = vpop.f32.mrf.mxu0
    %v472 = vadd.f32 %v128, %v471
    %v473 = vpop.f32.mrf.mxu0
    %474 = vmatprep.mubr.f32.mxu0 0.0
    %475 = vmatmul.mubr.f32.gmra.mxu0 %v99
    %v476 = vpop.f32.mrf.mxu0
    %v477 = vadd.f32 %v128, %v476
    %v478 = vpop.f32.mrf.mxu0
    %479 = vmatprep.mubr.f32.mxu0 0.0
    %480 = vmatmul.mubr.f32.gmra.mxu0 %v100
    %v481 = vpop.f32.mrf.mxu0
    %v482 = vadd.f32 %v128, %v481
    %v483 = vpop.f32.mrf.mxu0
    %484 = vmatprep.mubr.f32.mxu0 0.0
    %485 = vmatmul.mubr.f32.gmra.mxu0 %v101
    %v486 = vpop.f32.mrf.mxu0
    %v487 = vadd.f32 %v128, %v486
    %v488 = vpop.f32.mrf.mxu0
    %489 = vmatprep.mubr.f32.mxu0 0.0
    %490 = vmatmul.mubr.f32.gmra.mxu0 %v102
    %v491 = vpop.f32.mrf.mxu0
    %v492 = vadd.f32 %v128, %v491
    %v493 = vpop.f32.mrf.mxu0
    %494 = vmatprep.mubr.f32.mxu0 0.0
    %495 = vmatmul.mubr.f32.gmra.mxu0 %v103
    %v496 = vpop.f32.mrf.mxu0
    %v497 = vadd.f32 %v128, %v496
    %v498 = vpop.f32.mrf.mxu0
    %499 = vmatprep.mubr.f32.mxu0 0.0
    %500 = vmatmul.mubr.f32.gmra.mxu0 %v104
    %v501 = vpop.f32.mrf.mxu0
    %v502 = vadd.f32 %v128, %v501
    %v503 = vpop.f32.mrf.mxu0
    %504 = vmatprep.mubr.f32.mxu0 0.0
    %505 = vmatmul.mubr.f32.gmra.mxu0 %v105
    %v506 = vpop.f32.mrf.mxu0
    %v507 = vadd.f32 %v128, %v506
    %v508 = vpop.f32.mrf.mxu0
    %509 = vmatprep.mubr.f32.mxu0 0.0
    %510 = vmatmul.mubr.f32.gmra.mxu0 %v106
    %v511 = vpop.f32.mrf.mxu0
    %v512 = vadd.f32 %v128, %v511
    %v513 = vpop.f32.mrf.mxu0
    %514 = vdwg.mxu0
    %v515 = vmax.f32 %v197, 0.0
    %v516 = vmax.f32 %v202, 0.0
    %v517 = vmax.f32 %v207, 0.0
    %v518 = vmax.f32 %v212, 0.0
    %v519 = vmax.f32 %v217, 0.0
    %v520 = vmax.f32 %v222, 0.0
    %v521 = vmax.f32 %v227, 0.0
    %v522 = vmax.f32 %v232, 0.0
    %v523 = vmax.f32 %v237, 0.0
    %v524 = vmax.f32 %v242, 0.0
    %v525 = vmax.f32 %v247, 0.0
    %v526 = vmax.f32 %v252, 0.0
    %v527 = vmax.f32 %v257, 0.0
    %v528 = vmax.f32 %v262, 0.0
    %v529 = vmax.f32 %v267, 0.0
    %v530 = vmax.f32 %v272, 0.0
    %v531 = vmax.f32 %v277, 0.0
    %v532 = vmax.f32 %v282, 0.0
    %v533 = vmax.f32 %v287, 0.0
    %v534 = vmax.f32 %v292, 0.0
    %v535 = vmax.f32 %v297, 0.0
    %v536 = vmax.f32 %v302, 0.0
    %v537 = vmax.f32 %v307, 0.0
    %v538 = vmax.f32 %v312, 0.0
    %v539 = vmax.f32 %v317, 0.0
    %v540 = vmax.f32 %v322, 0.0
    %v541 = vmax.f32 %v327, 0.0
    %v542 = vmax.f32 %v332, 0.0
    %v543 = vmax.f32 %v337, 0.0
    %v544 = vmax.f32 %v342, 0.0
    %v545 = vmax.f32 %v347, 0.0
    %v546 = vmax.f32 %v352, 0.0
    %v547 = vmax.f32 %v357, 0.0
    %v548 = vmax.f32 %v362, 0.0
    %v549 = vmax.f32 %v367, 0.0
    %v550 = vmax.f32 %v372, 0.0
    %v551 = vmax.f32 %v377, 0.0
    %v552 = vmax.f32 %v382, 0.0
    %v553 = vmax.f32 %v387, 0.0
    %v554 = vmax.f32 %v392, 0.0
    %v555 = vmax.f32 %v397, 0.0
    %v556 = vmax.f32 %v402, 0.0
    %v557 = vmax.f32 %v407, 0.0
    %v558 = vmax.f32 %v412, 0.0
    %v559 = vmax.f32 %v417, 0.0
    %v560 = vmax.f32 %v422, 0.0
    %v561 = vmax.f32 %v427, 0.0
    %v562 = vmax.f32 %v432, 0.0
    %v563 = vmax.f32 %v437, 0.0
    %v564 = vmax.f32 %v442, 0.0
    %v565 = vmax.f32 %v447, 0.0
    %v566 = vmax.f32 %v452, 0.0
    %v567 = vmax.f32 %v457, 0.0
    %v568 = vmax.f32 %v462, 0.0
    %v569 = vmax.f32 %v467, 0.0
    %v570 = vmax.f32 %v472, 0.0
    %v571 = vmax.f32 %v477, 0.0
    %v572 = vmax.f32 %v482, 0.0
    %v573 = vmax.f32 %v487, 0.0
    %v574 = vmax.f32 %v492, 0.0
    %v575 = vmax.f32 %v497, 0.0
    %v576 = vmax.f32 %v502, 0.0
    %v577 = vmax.f32 %v507, 0.0
    %v578 = vmax.f32 %v512, 0.0
    %579 = vst [vmem:[#allocation7] sm:$0xff] %v515
    %580 = vst [vmem:[#allocation7 + $0x8] sm:$0xff] %v516
    %581 = vst [vmem:[#allocation7 + $0x10] sm:$0xff] %v517
    %582 = vst [vmem:[#allocation7 + $0x18] sm:$0xff] %v518
    %583 = vst [vmem:[#allocation7 + $0x20] sm:$0xff] %v519
    %584 = vst [vmem:[#allocation7 + $0x28] sm:$0xff] %v520
    %585 = vst [vmem:[#allocation7 + $0x30] sm:$0xff] %v521
    %586 = vst [vmem:[#allocation7 + $0x38] sm:$0xff] %v522
    %587 = vst [vmem:[#allocation7 + $0x40] sm:$0xff] %v523
    %588 = vst [vmem:[#allocation7 + $0x48] sm:$0xff] %v524
    %589 = vst [vmem:[#allocation7 + $0x50] sm:$0xff] %v525
    %590 = vst [vmem:[#allocation7 + $0x58] sm:$0xff] %v526
    %591 = vst [vmem:[#allocation7 + $0x60] sm:$0xff] %v527
    %592 = vst [vmem:[#allocation7 + $0x68] sm:$0xff] %v528
    %593 = vst [vmem:[#allocation7 + $0x70] sm:$0xff] %v529
    %594 = vst [vmem:[#allocation7 + $0x78] sm:$0xff] %v530
    %595 = vst [vmem:[#allocation7 + $0x80] sm:$0xff] %v531
    %596 = vst [vmem:[#allocation7 + $0x88] sm:$0xff] %v532
    %597 = vst [vmem:[#allocation7 + $0x90] sm:$0xff] %v533
    %598 = vst [vmem:[#allocation7 + $0x98] sm:$0xff] %v534
    %599 = vst [vmem:[#allocation7 + $0xa0] sm:$0xff] %v535
    %600 = vst [vmem:[#allocation7 + $0xa8] sm:$0xff] %v536
    %601 = vst [vmem:[#allocation7 + $0xb0] sm:$0xff] %v537
    %602 = vst [vmem:[#allocation7 + $0xb8] sm:$0xff] %v538
    %603 = vst [vmem:[#allocation7 + $0xc0] sm:$0xff] %v539
    %604 = vst [vmem:[#allocation7 + $0xc8] sm:$0xff] %v540
    %605 = vst [vmem:[#allocation7 + $0xd0] sm:$0xff] %v541
    %606 = vst [vmem:[#allocation7 + $0xd8] sm:$0xff] %v542
    %607 = vst [vmem:[#allocation7 + $0xe0] sm:$0xff] %v543
    %608 = vst [vmem:[#allocation7 + $0xe8] sm:$0xff] %v544
    %609 = vst [vmem:[#allocation7 + $0xf0] sm:$0xff] %v545
    %610 = vst [vmem:[#allocation7 + $0xf8] sm:$0xff] %v546
    %611 = vst [vmem:[#allocation7 + $0x100] sm:$0xff] %v547
    %612 = vst [vmem:[#allocation7 + $0x108] sm:$0xff] %v548
    %613 = vst [vmem:[#allocation7 + $0x110] sm:$0xff] %v549
    %614 = vst [vmem:[#allocation7 + $0x118] sm:$0xff] %v550
    %615 = vst [vmem:[#allocation7 + $0x120] sm:$0xff] %v551
    %616 = vst [vmem:[#allocation7 + $0x128] sm:$0xff] %v552
    %617 = vst [vmem:[#allocation7 + $0x130] sm:$0xff] %v553
    %618 = vst [vmem:[#allocation7 + $0x138] sm:$0xff] %v554
    %619 = vst [vmem:[#allocation7 + $0x140] sm:$0xff] %v555
    %620 = vst [vmem:[#allocation7 + $0x148] sm:$0xff] %v556
    %621 = vst [vmem:[#allocation7 + $0x150] sm:$0xff] %v557
    %622 = vst [vmem:[#allocation7 + $0x158] sm:$0xff] %v558
    %623 = vst [vmem:[#allocation7 + $0x160] sm:$0xff] %v559
    %624 = vst [vmem:[#allocation7 + $0x168] sm:$0xff] %v560
    %625 = vst [vmem:[#allocation7 + $0x170] sm:$0xff] %v561
    %626 = vst [vmem:[#allocation7 + $0x178] sm:$0xff] %v562
    %627 = vst [vmem:[#allocation7 + $0x180] sm:$0xff] %v563
    %628 = vst [vmem:[#allocation7 + $0x188] sm:$0xff] %v564
    %629 = vst [vmem:[#allocation7 + $0x190] sm:$0xff] %v565
    %630 = vst [vmem:[#allocation7 + $0x198] sm:$0xff] %v566
    %631 = vst [vmem:[#allocation7 + $0x1a0] sm:$0xff] %v567
    %632 = vst [vmem:[#allocation7 + $0x1a8] sm:$0xff] %v568
    %633 = vst [vmem:[#allocation7 + $0x1b0] sm:$0xff] %v569
    %634 = vst [vmem:[#allocation7 + $0x1b8] sm:$0xff] %v570
    %635 = vst [vmem:[#allocation7 + $0x1c0] sm:$0xff] %v571
    %636 = vst [vmem:[#allocation7 + $0x1c8] sm:$0xff] %v572
    %637 = vst [vmem:[#allocation7 + $0x1d0] sm:$0xff] %v573
    %638 = vst [vmem:[#allocation7 + $0x1d8] sm:$0xff] %v574
    %639 = vst [vmem:[#allocation7 + $0x1e0] sm:$0xff] %v575
    %640 = vst [vmem:[#allocation7 + $0x1e8] sm:$0xff] %v576
    %641 = vst [vmem:[#allocation7 + $0x1f0] sm:$0xff] %v577
    %642 = vst [vmem:[#allocation7 + $0x1f8] sm:$0xff] %v578
    // Predicated region
    $region22: #{tpu_custom_call.1} parent=1 // pred_check
      _
    $region23: #{tpu_custom_call.1} parent=1 // pred_check_branch
      %644 = sbr.rel (0) target = $region25
    $region24: #{tpu_custom_call.1} parent=1 // pred_region
      %s646 = ssub.s32 8192, 8192
      %647 = vsyncadd [#allocation4], %s646
      %s648 = sshll.u32 [#allocation7], 4
      %s649 = int_to_ptr.vmem [resolvable:$true] %s648
      %654 = dma.vmem_to_hbm [thread:$0]  %s649, 8192, %s3, [#allocation4], 128, 128, 8
    $region25: #{tpu_custom_call.1} parent=1 // pred_fallthru
      _
    // Predicated region
    $region26: #{tpu_custom_call.1} parent=1 // pred_check
      _
    $region27: #{tpu_custom_call.1} parent=1 // pred_check_branch
      %656 = sbr.rel (0) target = $region29
    $region28: #{tpu_custom_call.1} parent=1 // pred_region
      %657 = dma.done [#allocation4], 8192
    $region29: #{tpu_custom_call.1} parent=1 // pred_fallthru
      _
    %658 = vsyncpa [#allocation3], 1
    %659 = vsyncpa [#allocation6], 1
    %660 = vsyncpa [#allocation4], 1

</llo_original>
